<compile_context>
chip_gen: v6e
topology: v6e:2x2x1
jax: 0.10.0
libtpu: 0.0.40
codegen_flags: <defaults>
</compile_context>

<pallas_src>
import math

import jax
import jax.numpy as jnp
from jax.experimental import pallas as pl
from jax.experimental.pallas import tpu as pltpu


_GELU_C = math.sqrt(2.0 / math.pi)


def _cdiv(a, b):
    return -(-a // b)


def _round_up(a, m):
    return _cdiv(a, m) * m


# ----------------------------------------------------------------------------
# Kernels
# ----------------------------------------------------------------------------
def _gelu_tanh_f32(h):
    return 0.5 * h * (1.0 + jnp.tanh(_GELU_C * (h + 0.044715 * (h * h * h))))


def _ffn_partial(x_ref, w1_ref, b1_ref, w2_ref):
    """One hidden slice: (x @ W1_sl + b1_sl) -> GELU -> @ W2_sl, all accumulated f32."""
    th = w1_ref.shape[1]
    h_idx = pl.program_id(1)
    start = h_idx * th
    if th % 128 == 0:
        start = pl.multiple_of(start, 128)
    b1 = b1_ref[:, pl.ds(start, th)].astype(jnp.float32)

    h = jnp.dot(x_ref[...], w1_ref[...], preferred_element_type=jnp.float32) + b1
    g = _gelu_tanh_f32(h)
    return jnp.dot(g.astype(w2_ref.dtype), w2_ref[...],
                   preferred_element_type=jnp.float32)


def _ffn_kernel_f32_out(x_ref, w1_ref, b1_ref, w2_ref, b2_ref, o_ref):
    """f32 output: accumulate directly into the resident output tile (no scratch)."""
    h_idx = pl.program_id(1)

    @pl.when(h_idx == 0)
    def _():
        o_ref[...] = jnp.zeros_like(o_ref)

    o_ref[...] += _ffn_partial(x_ref, w1_ref, b1_ref, w2_ref)

    @pl.when(h_idx == pl.num_programs(1) - 1)
    def _():
        o_ref[...] += b2_ref[...].astype(jnp.float32)


def _ffn_kernel_lowp_out(x_ref, w1_ref, b1_ref, w2_ref, b2_ref, o_ref, acc_ref):
    """Low-precision output: f32 scratch accumulator, single cast+store at the end."""
    h_idx = pl.program_id(1)

    @pl.when(h_idx == 0)
    def _():
        acc_ref[...] = jnp.zeros_like(acc_ref)

    acc_ref[...] += _ffn_partial(x_ref, w1_ref, b1_ref, w2_ref)

    @pl.when(h_idx == pl.num_programs(1) - 1)
    def _():
        o_ref[...] = (acc_ref[...] + b2_ref[...].astype(jnp.float32)).astype(o_ref.dtype)


# ----------------------------------------------------------------------------
# Host-side configuration helpers
# ----------------------------------------------------------------------------
def _device_kind():
    try:
        return jax.devices()[0].device_kind.lower()
    except Exception:
        return ""


def _vmem_capacity_bytes():
    try:
        return int(pltpu.get_tpu_info().vmem_capacity_bytes)
    except Exception:
        # Fallback: v7x-class has 64 MiB per TensorCore, older chips 128 MiB.
        return 64 * 2**20 if "7" in _device_kind() else 128 * 2**20


def _vmem_estimate(tm, th, E, H, x_bytes, w_bytes, out_bytes, f32_out):
    est = (
        2 * tm * E * x_bytes      # x tile (double-buffered)
        + 2 * tm * E * out_bytes  # output tile
        + 2 * E * th * w_bytes    # W1 slice
        + 2 * th * E * w_bytes    # W2 slice
        + 2 * H * w_bytes         # resident b1
        + 2 * E * w_bytes         # resident b2
    )
    if not f32_out:
        est += tm * E * 4         # f32 accumulator scratch
    return est


def _pick_th(H, target):
    """Largest 128-multiple divisor of H that is <= target, else the full H."""
    if H % 128 != 0 or H <= 128:
        return H
    best = 128
    for cand in range(128, H + 1, 128):
        if H % cand == 0 and cand <= max(target, 128):
            best = cand
    return best


def _choose_tiles(M, E, H, x_bytes, w_bytes, out_bytes, f32_out,
                  tile_m, tile_h, vmem_cap, device_kind):
    row_mult = 8 if min(x_bytes, w_bytes, out_bytes) >= 4 else 16

    # Generation-tuned targets: v7x (64 MiB VMEM, ridge ~310 FLOP/B) -> tm~512;
    # v5e -> tm~512 and spend headroom on th; v6e-class -> tm~1024.
    if tile_m is None:
        tile_m = 512 if (vmem_cap <= 80 * 2**20 or "v5" in device_kind) else 1024
    if tile_h is None:
        tile_h = 1024

    th = _pick_th(H, tile_h)
    if M <= tile_m:
        tm = max(M, 1)                                   # full M: always legal
    else:
        tm = max(row_mult, (min(tile_m, M) // row_mult) * row_mult)

    budget = int(0.6 * vmem_cap)

    def fits(tm_, th_):
        return _vmem_estimate(tm_, th_, E, H, x_bytes, w_bytes, out_bytes,
                              f32_out) <= budget

    # Shrink order: th down to 512, then tm down to 256 (keeps intensity ~tm),
    # then th down to 128, then tm further.
    while not fits(tm, th):
        half_th_ok = th % 2 == 0 and H % (th // 2) == 0 and (th // 2) % 128 == 0
        if th > 512 and half_th_ok:
            th //= 2
        elif tm > 256 and tm > row_mult:
            tm = max(row_mult, ((tm // 2) // row_mult) * row_mult)
        elif th > 128 and half_th_ok:
            th //= 2
        elif tm > row_mult:
            tm = max(row_mult, ((tm // 2) // row_mult) * row_mult)
        else:
            break

    # Prefer an even number of M tiles: v7x shards the "parallel" axis across
    # 2 TensorCores, an odd tile count idles one core for part of the kernel.
    num_m = _cdiv(M, tm)
    if num_m > 1 and num_m % 2 == 1:
        tm_even = _round_up(_cdiv(M, num_m + 1), row_mult)
        if 0 < tm_even <= tm and _cdiv(M, tm_even) % 2 == 0 and fits(tm_even, th):
            tm = tm_even

    return tm, th


# ----------------------------------------------------------------------------
# Public wrapper
# ----------------------------------------------------------------------------
def feed_forward(x, w1, b1, w2, b2, *, tile_m=None, tile_h=None, compute_dtype=None):
    """FeedForward: GELU_tanh(x @ W1 + b1) @ W2 + b2.

    x: [B, T, E]; w1: [E, H]; b1: [H]; w2: [H, E]; b2: [E]  (H = 4*E).
    compute_dtype: pass jnp.bfloat16 to use the bf16 MXU path on v6e/v7x
      (accumulation and GELU remain f32). Default keeps the input dtype.
    """
    B, T, E = x.shape
    H = w1.shape[1]
    M = B * T
    out_dtype = x.dtype
    f32_out = out_dtype == jnp.float32

    cdtype = jnp.dtype(compute_dtype) if compute_dtype is not None else jnp.dtype(x.dtype)
    x2d = x.reshape(M, E).astype(cdtype)
    w1c = w1.astype(cdtype)
    w2c = w2.astype(cdtype)
    b1_2d = b1.reshape(1, H)
    b2_2d = b2.reshape(1, E)

    x_bytes = cdtype.itemsize
    w_bytes = cdtype.itemsize
    out_bytes = jnp.dtype(out_dtype).itemsize

    vmem_cap = _vmem_capacity_bytes()
    tm, th = _choose_tiles(M, E, H, x_bytes, w_bytes, out_bytes, f32_out,
                           tile_m, tile_h, vmem_cap, _device_kind())

    # Zero-pad rows so tm divides M exactly (padded rows are discarded below).
    M_pad = _round_up(M, tm)
    if M_pad != M:
        x2d = jnp.pad(x2d, ((0, M_pad - M), (0, 0)))

    n_m = M_pad // tm
    n_h = H // th

    vmem_est = _vmem_estimate(tm, th, E, H, x_bytes, w_bytes, out_bytes, f32_out)
    # Clamp the scoped-VMEM request to the physical per-core budget (v7x: 64 MiB).
    vmem_limit = int(min(int(0.85 * vmem_cap), max(32 * 2**20, int(vmem_est * 1.5))))

    cost = pl.CostEstimate(
        flops=4 * M_pad * E * H,                    # two matmuls
        transcendentals=M_pad * H,                  # tanh
        bytes_accessed=(
            M_pad * E * (x_bytes + out_bytes)       # x in, out
            + n_m * 2 * E * H * w_bytes             # W1 + W2 re-streamed per M tile
            + (H + E) * w_bytes                     # resident biases
        ),
    )

    if f32_out:
        kernel = _ffn_kernel_f32_out
        scratch = []
    else:
        kernel = _ffn_kernel_lowp_out
        scratch = [pltpu.VMEM((tm, E), jnp.float32)]

    # TODO(synk): if xprof on v7x still shows exposed weight DMA after the tile
    # changes, set pipeline_mode=pl.Buffered(3) on the two weight BlockSpecs.
    out2d = pl.pallas_call(
        kernel,
        out_shape=jax.ShapeDtypeStruct((M_pad, E), out_dtype),
        grid_spec=pltpu.PrefetchScalarGridSpec(
            num_scalar_prefetch=0,
            grid=(n_m, n_h),
            in_specs=[
                pl.BlockSpec((tm, E), lambda i, h: (i, 0)),   # x tile (resident over H)
                pl.BlockSpec((E, th), lambda i, h: (0, h)),   # W1 hidden slice
                pl.BlockSpec((1, H), lambda i, h: (0, 0)),    # b1 resident (in-kernel slice)
                pl.BlockSpec((th, E), lambda i, h: (h, 0)),   # W2 hidden slice
                pl.BlockSpec((1, E), lambda i, h: (0, 0)),    # b2 resident
            ],
            out_specs=pl.BlockSpec((tm, E), lambda i, h: (i, 0)),  # accumulator output
            scratch_shapes=scratch,
        ),
        compiler_params=pltpu.CompilerParams(
            dimension_semantics=("parallel", "arbitrary"),
            vmem_limit_bytes=vmem_limit,
        ),
        cost_estimate=cost,
    )(x2d, w1c, b1_2d, w2c, b2_2d)

    if M_pad != M:
        out2d = out2d[:M]
    return out2d.reshape(B, T, E)


def feed_forward_ref(x, w1, b1, w2, b2):
    """Pure-JAX reference matching the PyTorch module (tanh-approx GELU)."""
    h = x @ w1 + b1
    g = 0.5 * h * (1.0 + jnp.tanh(_GELU_C * (h + 0.044715 * h * h * h)))
    return g @ w2 + b2


if __name__ == "__main__":
    # Small config consistent with the module: emb_dim=32 -> hidden=128, batch=2, seq=8.
    emb_dim = 32
    hidden = 4 * emb_dim
    batch, seq = 2, 8

    key = jax.random.PRNGKey(0)
    kx, kw1, kb1, kw2, kb2 = jax.random.split(key, 5)

    x = jax.random.normal(kx, (batch, seq, emb_dim), dtype=jnp.float32)

    # Deterministic init mimicking nn.Linear's uniform(-1/sqrt(fan_in), +).
    lim1 = 1.0 / math.sqrt(emb_dim)
    lim2 = 1.0 / math.sqrt(hidden)
    w1 = jax.random.uniform(kw1, (emb_dim, hidden), jnp.float32, -lim1, lim1)
    b1 = jax.random.uniform(kb1, (hidden,), jnp.float32, -lim1, lim1)
    w2 = jax.random.uniform(kw2, (hidden, emb_dim), jnp.float32, -lim2, lim2)
    b2 = jax.random.uniform(kb2, (emb_dim,), jnp.float32, -lim2, lim2)

    out = feed_forward(x, w1, b1, w2, b2)
    jax.block_until_ready(out)

    ref = feed_forward_ref(x, w1, b1, w2, b2)
    assert out.shape == (batch, seq, emb_dim)
    assert jnp.allclose(out, ref, atol=1e-4, rtol=1e-4), (
        float(jnp.max(jnp.abs(out - ref)))
    )

    print("KERNEL_OK")
</pallas_src>

<mosaic_0001>
module attributes {stable_mosaic.version = 11 : i64} {
  func.func @_ffn_kernel_f32_out(%arg0: i32, %arg1: i32, %arg2: memref<16x32xf32, #tpu.memory_space<vmem>>, %arg3: memref<32x128xf32, #tpu.memory_space<vmem>>, %arg4: memref<1x128xf32, #tpu.memory_space<vmem>>, %arg5: memref<128x32xf32, #tpu.memory_space<vmem>>, %arg6: memref<1x32xf32, #tpu.memory_space<vmem>>, %arg7: memref<16x32xf32, #tpu.memory_space<vmem>>) attributes {dimension_semantics = [#tpu.dimension_semantics<parallel>, #tpu.dimension_semantics<arbitrary>], iteration_bounds = array<i64: 1, 1>, scalar_prefetch = 0 : i64, scratch_operands = 0 : i64, tpu.core_type = #tpu.core_type<tc>, window_params = [{transform_indices = @transform_0, window_bounds = array<i64: 16, 32>}, {transform_indices = @transform_1, window_bounds = array<i64: 32, 128>}, {pipeline_mode = #tpu.pipeline_mode<synchronous>, transform_indices = @transform_2, window_bounds = array<i64: 1, 128>}, {transform_indices = @transform_3, window_bounds = array<i64: 128, 32>}, {pipeline_mode = #tpu.pipeline_mode<synchronous>, transform_indices = @transform_4, window_bounds = array<i64: 1, 32>}, {transform_indices = @transform_5, window_bounds = array<i64: 16, 32>}]} {
    %c0_i32 = arith.constant 0 : i32
    %0 = arith.cmpi eq, %arg1, %c0_i32 : i32
    %1 = arith.extui %0 : i1 to i32
    %c0_i32_0 = arith.constant 0 : i32
    %2 = arith.cmpi ne, %1, %c0_i32_0 : i32
    scf.if %2 {
      %cst_18 = arith.constant 0.000000e+00 : f32
      %33 = vector.broadcast %cst_18 : f32 to vector<16x32xf32>
      %c0_19 = arith.constant 0 : index
      %c0_20 = arith.constant 0 : index
      %34 = vector.load %arg7[%c0_19, %c0_20] : memref<16x32xf32, #tpu.memory_space<vmem>>, vector<16x32xf32>
      tpu.vector_store %arg7[%c0_19, %c0_20], %33 {strides = array<i32>} : memref<16x32xf32, #tpu.memory_space<vmem>>, vector<16x32xf32>,
    } else {
    }
    %c0 = arith.constant 0 : index
    %c0_1 = arith.constant 0 : index
    %3 = vector.load %arg7[%c0, %c0_1] : memref<16x32xf32, #tpu.memory_space<vmem>>, vector<16x32xf32>
    %c128_i32 = arith.constant 128 : i32
    %4 = arith.muli %arg1, %c128_i32 : i32
    %5 = tpu.assume_multiple %4, 128 : i32
    %c0_2 = arith.constant 0 : index
    %6 = arith.index_cast %5 : i32 to index
    %7 = vector.load %arg4[%c0_2, %6] : memref<1x128xf32, #tpu.memory_space<vmem>>, vector<1x128xf32>
    %c0_3 = arith.constant 0 : index
    %c0_4 = arith.constant 0 : index
    %8 = vector.load %arg2[%c0_3, %c0_4] : memref<16x32xf32, #tpu.memory_space<vmem>>, vector<16x32xf32>
    %c0_5 = arith.constant 0 : index
    %c0_6 = arith.constant 0 : index
    %9 = vector.load %arg3[%c0_5, %c0_6] : memref<32x128xf32, #tpu.memory_space<vmem>>, vector<32x128xf32>
    %cst = arith.constant dense<0.000000e+00> : vector<16x128xf32>
    %10 = tpu.matmul %8, %9, %cst {dimension_numbers = #tpu.dot_dimension_numbers<[1], [0], [0], [1], [0, 0, 1, 1], [], []>} : vector<16x32xf32>, vector<32x128xf32>, vector<16x128xf32> -> vector<16x128xf32>
    %11 = vector.broadcast %7 : vector<1x128xf32> to vector<16x128xf32>
    %12 = arith.addf %10, %11 : vector<16x128xf32>
    %cst_7 = arith.constant 5.000000e-01 : f32
    %13 = vector.broadcast %cst_7 : f32 to vector<16x128xf32>
    %14 = arith.mulf %13, %12 : vector<16x128xf32>
    %15 = arith.mulf %12, %12 : vector<16x128xf32>
    %16 = arith.mulf %15, %12 : vector<16x128xf32>
    %cst_8 = arith.constant 4.471500e-02 : f32
    %17 = vector.broadcast %cst_8 : f32 to vector<16x128xf32>
    %18 = arith.mulf %17, %16 : vector<16x128xf32>
    %19 = arith.addf %12, %18 : vector<16x128xf32>
    %cst_9 = arith.constant 0.797884583 : f32
    %20 = vector.broadcast %cst_9 : f32 to vector<16x128xf32>
    %21 = arith.mulf %20, %19 : vector<16x128xf32>
    %22 = math.tanh %21 : vector<16x128xf32>
    %cst_10 = arith.constant 1.000000e+00 : f32
    %23 = vector.broadcast %cst_10 : f32 to vector<16x128xf32>
    %24 = arith.addf %23, %22 : vector<16x128xf32>
    %25 = arith.mulf %14, %24 : vector<16x128xf32>
    %c0_11 = arith.constant 0 : index
    %c0_12 = arith.constant 0 : index
    %26 = vector.load %arg5[%c0_11, %c0_12] : memref<128x32xf32, #tpu.memory_space<vmem>>, vector<128x32xf32>
    %cst_13 = arith.constant dense<0.000000e+00> : vector<16x32xf32>
    %27 = tpu.matmul %25, %26, %cst_13 {dimension_numbers = #tpu.dot_dimension_numbers<[1], [0], [0], [1], [0, 0, 1, 1], [], []>} : vector<16x128xf32>, vector<128x32xf32>, vector<16x32xf32> -> vector<16x32xf32>
    %28 = arith.addf %3, %27 : vector<16x32xf32>
    %c0_14 = arith.constant 0 : index
    %c0_15 = arith.constant 0 : index
    %29 = vector.load %arg7[%c0_14, %c0_15] : memref<16x32xf32, #tpu.memory_space<vmem>>, vector<16x32xf32>
    tpu.vector_store %arg7[%c0_14, %c0_15], %28 {strides = array<i32>} : memref<16x32xf32, #tpu.memory_space<vmem>>, vector<16x32xf32>,
    %c0_i32_16 = arith.constant 0 : i32
    %30 = arith.cmpi eq, %arg1, %c0_i32_16 : i32
    %31 = arith.extui %30 : i1 to i32
    %c0_i32_17 = arith.constant 0 : i32
    %32 = arith.cmpi ne, %31, %c0_i32_17 : i32
    scf.if %32 {
      %c0_18 = arith.constant 0 : index
      %c0_19 = arith.constant 0 : index
      %33 = vector.load %arg7[%c0_18, %c0_19] : memref<16x32xf32, #tpu.memory_space<vmem>>, vector<16x32xf32>
      %c0_20 = arith.constant 0 : index
      %c0_21 = arith.constant 0 : index
      %34 = vector.load %arg6[%c0_20, %c0_21] : memref<1x32xf32, #tpu.memory_space<vmem>>, vector<1x32xf32>
      %35 = vector.broadcast %34 : vector<1x32xf32> to vector<16x32xf32>
      %36 = arith.addf %33, %35 : vector<16x32xf32>
      %c0_22 = arith.constant 0 : index
      %c0_23 = arith.constant 0 : index
      %37 = vector.load %arg7[%c0_22, %c0_23] : memref<16x32xf32, #tpu.memory_space<vmem>>, vector<16x32xf32>
      tpu.vector_store %arg7[%c0_22, %c0_23], %36 {strides = array<i32>} : memref<16x32xf32, #tpu.memory_space<vmem>>, vector<16x32xf32>,
    } else {
    }
    return
  }
  func.func @transform_0(%arg0: i32, %arg1: i32) -> (i32, i32) {
    %c0_i32 = arith.constant 0 : i32
    %c0_i32_0 = arith.constant 0 : i32
    return %arg0, %c0_i32 : i32, i32
  }
  func.func @transform_1(%arg0: i32, %arg1: i32) -> (i32, i32) {
    %c0_i32 = arith.constant 0 : i32
    %c0_i32_0 = arith.constant 0 : i32
    return %c0_i32, %arg1 : i32, i32
  }
  func.func @transform_2(%arg0: i32, %arg1: i32) -> (i32, i32) {
    %c0_i32 = arith.constant 0 : i32
    %c0_i32_0 = arith.constant 0 : i32
    %c0_i32_1 = arith.constant 0 : i32
    return %c0_i32, %c0_i32_0 : i32, i32
  }
  func.func @transform_3(%arg0: i32, %arg1: i32) -> (i32, i32) {
    %c0_i32 = arith.constant 0 : i32
    %c0_i32_0 = arith.constant 0 : i32
    return %arg1, %c0_i32 : i32, i32
  }
  func.func @transform_4(%arg0: i32, %arg1: i32) -> (i32, i32) {
    %c0_i32 = arith.constant 0 : i32
    %c0_i32_0 = arith.constant 0 : i32
    %c0_i32_1 = arith.constant 0 : i32
    return %c0_i32, %c0_i32_0 : i32, i32
  }
  func.func @transform_5(%arg0: i32, %arg1: i32) -> (i32, i32) {
    %c0_i32 = arith.constant 0 : i32
    %c0_i32_0 = arith.constant 0 : i32
    return %arg0, %c0_i32 : i32, i32
  }
}

</mosaic_0001>

<llo_original>
// kernel: tpu_custom_call.1
$region0: #{tpu_custom_call.1}
  #allocation0 [shape = 'u32[]', space=smem, size = 0x4, offset = 0x4, fixed_abs, tag = 'smem constant byte address 0x4 - core index']
  #allocation1 [shape = 'u32[144,128]{1,0:T(1,128)}', space=vmem, size = 0x12000, scoped, tag = 'internal scratch']
  %s0 = inlined_call_operand.vmem [shape: f32[16,32], index: 0, kind: input, shape index: {}]
  %s1 = inlined_call_operand.vmem [shape: f32[32,128], index: 1, kind: input, shape index: {}]
  %s2 = inlined_call_operand.vmem [shape: f32[1,128], index: 2, kind: input, shape index: {}]
  %s3 = inlined_call_operand.vmem [shape: f32[128,32], index: 3, kind: input, shape index: {}]
  %s4 = inlined_call_operand.vmem [shape: f32[1,32], index: 4, kind: input, shape index: {}]
  %s5 = inlined_call_operand.hbm [shape: f32[16,32], index: 5, kind: output, shape index: {}]
  %s6 = sld [smem:[#allocation0]]
  $region38: #{tpu_custom_call.1} parent=0
    _
  %s8 = ssub.s32 1, %s6
  %s9 = scalar_select 0, %s8, %s6
  $region1: #{tpu_custom_call.1} parent=0
    #allocation2 [shape = 'u8[8192]{0}', space=vmem, size = 0x2000, scoped, tag = 'output window, operand 0, single buffered']
    #allocation3 [shape = 's32[1]{0}', space=sflag, size = 0x4, scoped, tag = 'scoped memory for tpu_custom_call.1']
    %10 = vsyncpa [#allocation3], 0
    // Predicated region
    $region2: #{tpu_custom_call.1} parent=1 // pred_check
      _
    $region3: #{tpu_custom_call.1} parent=1 // pred_check_branch
      %12 = sbr.rel (0) target = $region5
    $region4: #{tpu_custom_call.1} parent=1 // pred_region
      _
    $region5: #{tpu_custom_call.1} parent=1 // pred_fallthru
      _
    // Predicated region
    $region6: #{tpu_custom_call.1} parent=1 // pred_check
      _
    $region7: #{tpu_custom_call.1} parent=1 // pred_check_branch
      %14 = sbr.rel (0) target = $region9
    $region8: #{tpu_custom_call.1} parent=1 // pred_region
      _
    $region9: #{tpu_custom_call.1} parent=1 // pred_fallthru
      _
    // Predicated region
    $region10: #{tpu_custom_call.1} parent=1 // pred_check
      _
    $region11: #{tpu_custom_call.1} parent=1 // pred_check_branch
      %16 = sbr.rel (0) target = $region13
    $region12: #{tpu_custom_call.1} parent=1 // pred_region
      _
    $region13: #{tpu_custom_call.1} parent=1 // pred_fallthru
      _
    // Predicated region
    $region14: #{tpu_custom_call.1} parent=1 // pred_check
      _
    $region15: #{tpu_custom_call.1} parent=1 // pred_check_branch
      %18 = sbr.rel (0) target = $region17
    $region16: #{tpu_custom_call.1} parent=1 // pred_region
      _
    $region17: #{tpu_custom_call.1} parent=1 // pred_fallthru
      _
    // Predicated region
    $region18: #{tpu_custom_call.1} parent=1 // pred_check
      _
    $region19: #{tpu_custom_call.1} parent=1 // pred_check_branch
      %20 = sbr.rel (0) target = $region21
    $region20: #{tpu_custom_call.1} parent=1 // pred_region
      _
    $region21: #{tpu_custom_call.1} parent=1 // pred_fallthru
      _
    %p21 = scmp.eq.s32.totalorder 0, 0
    // Predicated region
    $region22: #{tpu_custom_call.1} parent=1 // pred_check
      %p22 = pneg %p21
    $region23: #{tpu_custom_call.1} parent=1 // pred_check_branch
      %24 = sbr.rel (%p22) target = $region25
    $region24: #{tpu_custom_call.1} parent=1 // pred_region
      %vm25 = vcmask 261120
      %26 = vst.msk [vmem:[#allocation2] sm:$0xff] %vm25, 0.0
      %27 = vst.msk [vmem:[#allocation2 + $0x8] sm:$0xff] %vm25, 0.0
    $region25: #{tpu_custom_call.1} parent=1 // pred_fallthru
      _
    %v28 = vld [vmem:[#allocation2] sm:$0xff]
    %v29 = vld [vmem:[#allocation2 + $0x8] sm:$0xff]
    %s30 = smul.u32 0, 128
    %s31 = sshra.s32 %s30, 7
    %s32 = sand.u32 %s30, 127
    %s33 = scalar_lea.vmem %s2, %s31
    %v34 = vld [vmem:[%s33] sm:$0x1]
    %v35 = vld [vmem:[%s0] sm:$0xff]
    %v36 = vld [vmem:[%s0 + $0x8] sm:$0xff]
    %v37 = vld [vmem:[%s1] sm:$0xff]
    %v38 = vld [vmem:[%s1 + $0x8] sm:$0xff]
    %v39 = vld [vmem:[%s1 + $0x10] sm:$0xff]
    %v40 = vld [vmem:[%s1 + $0x18] sm:$0xff]
    %v42 = vlaneseq
    %v43 = vshrl.u32 %v42, 7
    %v44 = vsub.s32 0, %v43
    %v45 = vrot.slane %v34, %v44
    %vm47 = vcmask 261120
    %v49 = vsel %vm47, %v35, 0
    %v52 = vsel %vm47, %v36, 0
    %54 = vmatprep.subr.mxu0 0.0
    %55 = vmatpush1.msra.mxu0 0.0
    %56 = vmatprep.subr.mxu0 0.0
    %57 = vmatpush1.msra.mxu0 0.0
    %58 = vmatprep.subr.mxu0 0.0
    %59 = vmatpush1.msra.mxu0 0.0
    %60 = vmatprep.subr.mxu0 0.0
    %61 = vmatpush1.msra.mxu0 0.0
    %62 = vmatprep.subr.mxu0 0.0
    %63 = vmatpush1.msra.mxu0 0.0
    %64 = vmatprep.subr.mxu0 0.0
    %65 = vmatpush1.msra.mxu0 0.0
    %66 = vmatprep.subr.mxu0 0.0
    %67 = vmatpush1.msra.mxu0 0.0
    %68 = vmatprep.subr.mxu0 0.0
    %69 = vmatpush1.msra.mxu0 0.0
    %70 = vmatprep.subr.mxu0 0.0
    %71 = vmatpush1.msra.mxu0 0.0
    %72 = vmatprep.subr.mxu0 0.0
    %73 = vmatpush1.msra.mxu0 0.0
    %74 = vmatprep.subr.mxu0 0.0
    %75 = vmatpush1.msra.mxu0 0.0
    %76 = vmatprep.subr.mxu0 0.0
    %77 = vmatpush1.msra.mxu0 0.0
    %78 = vmatprep.subr.mxu0 0.0
    %79 = vmatpush1.msra.mxu0 %v40
    %80 = vmatprep.subr.mxu0 0.0
    %81 = vmatpush1.msra.mxu0 %v39
    %82 = vmatprep.subr.mxu0 0.0
    %83 = vmatpush1.msra.mxu0 %v38
    %84 = vmatprep.subr.mxu0 0.0
    %85 = vmatpush1.msra.mxu0 %v37
    %86 = vmatprep.subr.mxu0 0.0
    %87 = vmatpush2.msra.mxu0 0.0
    %88 = vmatprep.subr.mxu0 0.0
    %89 = vmatpush2.msra.mxu0 0.0
    %90 = vmatprep.subr.mxu0 0.0
    %91 = vmatpush2.msra.mxu0 0.0
    %92 = vmatprep.subr.mxu0 0.0
    %93 = vmatpush2.msra.mxu0 0.0
    %94 = vmatprep.subr.mxu0 0.0
    %95 = vmatpush2.msra.mxu0 0.0
    %96 = vmatprep.subr.mxu0 0.0
    %97 = vmatpush2.msra.mxu0 0.0
    %98 = vmatprep.subr.mxu0 0.0
    %99 = vmatpush2.msra.mxu0 0.0
    %100 = vmatprep.subr.mxu0 0.0
    %101 = vmatpush2.msra.mxu0 0.0
    %102 = vmatprep.subr.mxu0 0.0
    %103 = vmatpush2.msra.mxu0 0.0
    %104 = vmatprep.subr.mxu0 0.0
    %105 = vmatpush2.msra.mxu0 0.0
    %106 = vmatprep.subr.mxu0 0.0
    %107 = vmatpush2.msra.mxu0 0.0
    %108 = vmatprep.subr.mxu0 0.0
    %109 = vmatpush2.msra.mxu0 0.0
    %110 = vmatprep.subr.mxu0 0.0
    %111 = vmatpush2.msra.mxu0 0.0
    %112 = vmatprep.subr.mxu0 0.0
    %113 = vmatpush2.msra.mxu0 0.0
    %114 = vmatprep.subr.mxu0 0.0
    %115 = vmatpush2.msra.mxu0 0.0
    %116 = vmatprep.subr.mxu0 0.0
    %117 = vmatpush2.msra.mxu0 0.0
    %118 = vmatprep.mubr.f32.mxu0 0.0
    %119 = vmatmul.mubr.f32.gmra.mxu0 %v49
    %v120 = vpop.f32.mrf.mxu0
    %v121 = vadd.f32 %v45, %v120
    %v122 = vpop.f32.mrf.mxu0
    %123 = vmatprep.mubr.f32.mxu0 0.0
    %124 = vmatmul.mubr.f32.gmra.mxu0 %v52
    %v125 = vpop.f32.mrf.mxu0
    %v126 = vadd.f32 %v45, %v125
    %v127 = vpop.f32.mrf.mxu0
    %128 = vdwg.mxu0
    %v129 = vmul.f32 %v121, 0.5
    %v130 = vmul.f32 %v126, 0.5
    %v131 = vmul.f32 %v121, %v121
    %v132 = vmul.f32 %v126, %v126
    %v133 = vmul.f32 %v131, %v121
    %v134 = vmul.f32 %v132, %v126
    %v135 = vmul.f32 %v133, 0.044715
    %v136 = vmul.f32 %v134, 0.044715
    %v137 = vadd.f32 %v121, %v135
    %v138 = vadd.f32 %v126, %v136
    %v139 = vmul.f32 %v137, 0.7978846
    %v140 = vmul.f32 %v138, 0.7978846
    %v141 = vtanh.pop %v139
    %v142 = vtanh.pop %v140
    %v143 = vadd.f32 %v141, 1.0
    %v144 = vadd.f32 %v142, 1.0
    %v145 = vmul.f32 %v129, %v143
    %v146 = vmul.f32 %v130, %v144
    %v147 = vld [vmem:[%s3] sm:$0xff]
    %v148 = vld [vmem:[%s3 + $0x8] sm:$0xff]
    %v149 = vld [vmem:[%s3 + $0x10] sm:$0xff]
    %v150 = vld [vmem:[%s3 + $0x18] sm:$0xff]
    %v151 = vld [vmem:[%s3 + $0x20] sm:$0xff]
    %v152 = vld [vmem:[%s3 + $0x28] sm:$0xff]
    %v153 = vld [vmem:[%s3 + $0x30] sm:$0xff]
    %v154 = vld [vmem:[%s3 + $0x38] sm:$0xff]
    %v155 = vld [vmem:[%s3 + $0x40] sm:$0xff]
    %v156 = vld [vmem:[%s3 + $0x48] sm:$0xff]
    %v157 = vld [vmem:[%s3 + $0x50] sm:$0xff]
    %v158 = vld [vmem:[%s3 + $0x58] sm:$0xff]
    %v159 = vld [vmem:[%s3 + $0x60] sm:$0xff]
    %v160 = vld [vmem:[%s3 + $0x68] sm:$0xff]
    %v161 = vld [vmem:[%s3 + $0x70] sm:$0xff]
    %v162 = vld [vmem:[%s3 + $0x78] sm:$0xff]
    %163 = vmatprep.subr.mxu0 0.0
    %164 = vmatpush1.msra.mxu0 %v162
    %165 = vmatprep.subr.mxu0 0.0
    %166 = vmatpush1.msra.mxu0 %v161
    %167 = vmatprep.subr.mxu0 0.0
    %168 = vmatpush1.msra.mxu0 %v160
    %169 = vmatprep.subr.mxu0 0.0
    %170 = vmatpush1.msra.mxu0 %v159
    %171 = vmatprep.subr.mxu0 0.0
    %172 = vmatpush1.msra.mxu0 %v158
    %173 = vmatprep.subr.mxu0 0.0
    %174 = vmatpush1.msra.mxu0 %v157
    %175 = vmatprep.subr.mxu0 0.0
    %176 = vmatpush1.msra.mxu0 %v156
    %177 = vmatprep.subr.mxu0 0.0
    %178 = vmatpush1.msra.mxu0 %v155
    %179 = vmatprep.subr.mxu0 0.0
    %180 = vmatpush1.msra.mxu0 %v154
    %181 = vmatprep.subr.mxu0 0.0
    %182 = vmatpush1.msra.mxu0 %v153
    %183 = vmatprep.subr.mxu0 0.0
    %184 = vmatpush1.msra.mxu0 %v152
    %185 = vmatprep.subr.mxu0 0.0
    %186 = vmatpush1.msra.mxu0 %v151
    %187 = vmatprep.subr.mxu0 0.0
    %188 = vmatpush1.msra.mxu0 %v150
    %189 = vmatprep.subr.mxu0 0.0
    %190 = vmatpush1.msra.mxu0 %v149
    %191 = vmatprep.subr.mxu0 0.0
    %192 = vmatpush1.msra.mxu0 %v148
    %193 = vmatprep.subr.mxu0 0.0
    %194 = vmatpush1.msra.mxu0 %v147
    %195 = vmatprep.subr.mxu0 0.0
    %196 = vmatpush2.msra.mxu0 0.0
    %197 = vmatprep.subr.mxu0 0.0
    %198 = vmatpush2.msra.mxu0 0.0
    %199 = vmatprep.subr.mxu0 0.0
    %200 = vmatpush2.msra.mxu0 0.0
    %201 = vmatprep.subr.mxu0 0.0
    %202 = vmatpush2.msra.mxu0 0.0
    %203 = vmatprep.subr.mxu0 0.0
    %204 = vmatpush2.msra.mxu0 0.0
    %205 = vmatprep.subr.mxu0 0.0
    %206 = vmatpush2.msra.mxu0 0.0
    %207 = vmatprep.subr.mxu0 0.0
    %208 = vmatpush2.msra.mxu0 0.0
    %209 = vmatprep.subr.mxu0 0.0
    %210 = vmatpush2.msra.mxu0 0.0
    %211 = vmatprep.subr.mxu0 0.0
    %212 = vmatpush2.msra.mxu0 0.0
    %213 = vmatprep.subr.mxu0 0.0
    %214 = vmatpush2.msra.mxu0 0.0
    %215 = vmatprep.subr.mxu0 0.0
    %216 = vmatpush2.msra.mxu0 0.0
    %217 = vmatprep.subr.mxu0 0.0
    %218 = vmatpush2.msra.mxu0 0.0
    %219 = vmatprep.subr.mxu0 0.0
    %220 = vmatpush2.msra.mxu0 0.0
    %221 = vmatprep.subr.mxu0 0.0
    %222 = vmatpush2.msra.mxu0 0.0
    %223 = vmatprep.subr.mxu0 0.0
    %224 = vmatpush2.msra.mxu0 0.0
    %225 = vmatprep.subr.mxu0 0.0
    %226 = vmatpush2.msra.mxu0 0.0
    %227 = vmatprep.mubr.f32.mxu0 0.0
    %228 = vmatmul.mubr.f32.gmra.mxu0 %v145
    %v229 = vpop.f32.mrf.mxu0
    %v230 = vadd.f32 0.0, %v229
    %v231 = vpop.f32.mrf.mxu0
    %232 = vmatprep.mubr.f32.mxu0 0.0
    %233 = vmatmul.mubr.f32.gmra.mxu0 %v146
    %v234 = vpop.f32.mrf.mxu0
    %v235 = vadd.f32 0.0, %v234
    %v236 = vpop.f32.mrf.mxu0
    %237 = vdwg.mxu0
    %v238 = vadd.f32 %v28, %v230
    %v239 = vadd.f32 %v29, %v235
    %240 = vst.msk [vmem:[#allocation2] sm:$0xff] %vm47, %v238
    %241 = vst.msk [vmem:[#allocation2 + $0x8] sm:$0xff] %vm47, %v239
    // Predicated region
    $region26: #{tpu_custom_call.1} parent=1 // pred_check
      %p242 = pneg %p21
    $region27: #{tpu_custom_call.1} parent=1 // pred_check_branch
      %244 = sbr.rel (%p242) target = $region29
    $region28: #{tpu_custom_call.1} parent=1 // pred_region
      %v245 = vld [vmem:[#allocation2] sm:$0xff]
      %v246 = vld [vmem:[#allocation2 + $0x8] sm:$0xff]
      %v247 = vld [vmem:[%s4] sm:$0x1]
      %v249 = vlaneseq
      %v250 = vshrl.u32 %v249, 7
      %v251 = vsub.s32 0, %v250
      %v252 = vrot.slane %v247, %v251
      %v254 = vadd.f32 %v245, %v252
      %v255 = vadd.f32 %v246, %v252
      %256 = vst.msk [vmem:[#allocation2] sm:$0xff] %vm47, %v254
      %257 = vst.msk [vmem:[#allocation2 + $0x8] sm:$0xff] %vm47, %v255
    $region29: #{tpu_custom_call.1} parent=1 // pred_fallthru
      _
    // Predicated region
    $region30: #{tpu_custom_call.1} parent=1 // pred_check
      _
    $region31: #{tpu_custom_call.1} parent=1 // pred_check_branch
      %259 = sbr.rel (0) target = $region33
    $region32: #{tpu_custom_call.1} parent=1 // pred_region
      %s261 = ssub.s32 256, 256
      %262 = vsyncadd [#allocation3], %s261
      %s263 = sshll.u32 [#allocation2], 4
      %s264 = int_to_ptr.vmem [resolvable:$true] %s263
      %269 = dma.vmem_to_hbm [thread:$0]  %s264, 256, %s5, [#allocation3], 128, 128, 8
    $region33: #{tpu_custom_call.1} parent=1 // pred_fallthru
      _
    // Predicated region
    $region34: #{tpu_custom_call.1} parent=1 // pred_check
      _
    $region35: #{tpu_custom_call.1} parent=1 // pred_check_branch
      %271 = sbr.rel (0) target = $region37
    $region36: #{tpu_custom_call.1} parent=1 // pred_region
      %272 = dma.done [#allocation3], 256
    $region37: #{tpu_custom_call.1} parent=1 // pred_fallthru
      _
    %273 = vsyncpa [#allocation3], 1

</llo_original>
